<compile_context>
chip_gen: v5e
topology: v5e:2x2
jax: 0.10.0
libtpu: 0.0.40
codegen_flags: <defaults>
</compile_context>

<pallas_src>
import functools

import jax
import jax.numpy as jnp
import numpy as np
from jax.experimental import pallas as pl
from jax.experimental.pallas import tpu as pltpu


def _conv2d_kernel(x_ref, w_ref, o_ref, col_ref, *, KH, KW, W, OH):
    """Valid 2-D conv as a single (CO, K+1) x (K+1, Nb*OH*W) MXU matmul.

    x_ref:   (Nb, CI, H*W)        VMEM — NCHW image(s), spatial flattened.
    w_ref:   (CO, K+1)            VMEM — (kh, kw, ci)-ordered weight + bias col.
    o_ref:   (Nb, CO, OH*W)       VMEM — lane-dense "wide" output (W, not OW).
    col_ref: (K+1, Nb*OH*W)       VMEM scratch — wide im2col slab + ones row.
    """
    Nb, CI, HW = x_ref.shape
    CO, K1 = w_ref.shape
    K = K1 - 1
    OHW = OH * W  # lanes per image (includes KW-1 over-computed cols per row)

    # Ones row -> bias is part of the contraction (no separate broadcast add).
    col_ref[K:K + 1, :] = jnp.ones((1, Nb * OHW), dtype=col_ref.dtype)

    # Wide im2col: every tap is a contiguous lane slice of the flattened image,
    # written as CI full-width sublane rows (lane-dense, no reshape).
    for b in range(Nb):
        base = b * OHW
        for kh in range(KH):
            for kw in range(KW):
                tap = kh * KW + kw
                off = kh * W + kw
                span = min(OHW, HW - off)  # last-row taps would overrun by < KW
                col_ref[tap * CI:(tap + 1) * CI, base:base + span] = (
                    x_ref[b, :, off:off + span])
                if span < OHW:
                    # Deterministically zero the few tail lanes (they only feed
                    # the over-computed columns that the wrapper slices off).
                    col_ref[tap * CI:(tap + 1) * CI, base + span:base + OHW] = (
                        jnp.zeros((CI, OHW - span), dtype=col_ref.dtype))

    # Single fused matmul; operands in native dtype, f32 accumulate on the MXU.
    acc = jnp.dot(w_ref[...], col_ref[...],
                  preferred_element_type=jnp.float32)      # (CO, Nb*OHW)

    for b in range(Nb):
        o_ref[b] = acc[:, b * OHW:(b + 1) * OHW].astype(o_ref.dtype)


def _pick_block_n(N, CI, HW, CO, K, OHW, itemsize):
    """Images per grid step: amortize ~0.35us/step, fill the MXU pipe, keep the
    parallel grid >= 2 when possible (v7x has 2 TensorCores), fit VMEM."""
    nb = max(1, -(-256 // OHW))                      # target M >= ~256 lanes
    nb = min(nb, N)
    # VMEM budget (double-buffered input/output + col slab) << scoped limit.
    per_image = (2 * CI * HW + (K + 1) * OHW + 2 * CO * OHW) * itemsize
    nb = max(1, min(nb, (8 * 1024 * 1024) // max(per_image, 1)))
    while nb > 1 and -(-N // nb) < 2:                # keep >= 2 grid steps
        nb -= 1
    return nb


def norm_conv2d(x_nchw, weight_oihw, bias, norm: str = "none", block_n=None):
    """Forward of NormConv2d (stride=1, padding=0, dilation=1, groups=1)."""
    assert norm == "none", "only the default 'none' (Identity) norm is implemented"
    N, CI, H, W = x_nchw.shape
    CO, CIw, KH, KW = weight_oihw.shape
    assert CIw == CI
    OH, OW = H - KH + 1, W - KW + 1
    K = KH * KW * CI
    OHW = OH * W                       # wide output lanes per image
    itemsize = x_nchw.dtype.itemsize

    # Free contiguous reshape (no transpose / relayout pass of the activation).
    x3 = x_nchw.reshape(N, CI, H * W)
    # Tiny weight prep in the wrapper: (CO, KH, KW, CI) -> (CO, K), + bias col.
    w_t = jnp.transpose(weight_oihw, (0, 2, 3, 1)).reshape(CO, K)
    w_aug = jnp.concatenate([w_t, bias.reshape(CO, 1)], axis=1).astype(x_nchw.dtype)

    Nb = _pick_block_n(N, CI, H * W, CO, K, OHW, itemsize) if block_n is None else block_n
    n_steps = pl.cdiv(N, Nb)
    N_pad = n_steps * Nb
    if N_pad != N:
        x3 = jnp.pad(x3, ((0, N_pad - N), (0, 0), (0, 0)))

    cost = pl.CostEstimate(
        flops=2 * N * CO * (K + 1) * OH * W,
        transcendentals=0,
        bytes_accessed=(N * CI * H * W + CO * (K + 1) + N * CO * OHW) * itemsize,
    )

    kernel = functools.partial(_conv2d_kernel, KH=KH, KW=KW, W=W, OH=OH)

    out = pl.pallas_call(
        kernel,
        out_shape=jax.ShapeDtypeStruct((N_pad, CO, OHW), x_nchw.dtype),
        grid=(n_steps,),
        in_specs=[
            # Nb images per grid step, NCHW (channels on sublanes, HW on lanes).
            pl.BlockSpec((Nb, CI, H * W), lambda n: (n, 0, 0)),
            # Weight (+bias column): same block every step -> stays VMEM-resident.
            pl.BlockSpec((CO, K + 1), lambda n: (0, 0)),
        ],
        out_specs=pl.BlockSpec((Nb, CO, OHW), lambda n: (n, 0, 0)),
        scratch_shapes=[pltpu.VMEM((K + 1, Nb * OHW), x_nchw.dtype)],
        compiler_params=pltpu.CompilerParams(
            dimension_semantics=("parallel",),   # megacore sharding on v7x
            vmem_limit_bytes=32 * 1024 * 1024,
        ),
        cost_estimate=cost,
    )(x3, w_aug)

    # Free reshape back to NCHW + tiny static slice dropping the KW-1
    # over-computed columns per output row (no transpose pass).
    out = out[:N].reshape(N, CO, OH, W)[:, :, :, :OW]
    return out


if __name__ == "__main__":
    # Module config: NormConv2d(4, 8, kernel_size=3)  (norm='none' default)
    N, CI, H, W = 2, 4, 16, 16
    CO, KH, KW = 8, 3, 3

    key = jax.random.PRNGKey(0)
    kx, kw, kb = jax.random.split(key, 3)

    x = jax.random.normal(kx, (N, CI, H, W), dtype=jnp.float32)

    # Deterministic PyTorch-like init: U(-bound, bound), bound = 1/sqrt(CI*KH*KW)
    fan_in = CI * KH * KW
    bound = 1.0 / np.sqrt(fan_in)
    weight = jax.random.uniform(kw, (CO, CI, KH, KW), jnp.float32, -bound, bound)
    bias = jax.random.uniform(kb, (CO,), jnp.float32, -bound, bound)

    out = jax.jit(norm_conv2d, static_argnames=("norm", "block_n"))(x, weight, bias)
    out = jax.block_until_ready(out)

    # Reference: XLA convolution with PyTorch conv semantics (NCHW / OIHW).
    ref = jax.lax.conv_general_dilated(
        x, weight, window_strides=(1, 1), padding="VALID",
        dimension_numbers=("NCHW", "OIHW", "NCHW"),
    ) + bias[None, :, None, None]
    ref = jax.block_until_ready(ref)

    assert out.shape == (N, CO, H - KH + 1, W - KW + 1), out.shape
    np.testing.assert_allclose(np.asarray(out), np.asarray(ref), rtol=1e-4, atol=1e-4)
    print("KERNEL_OK")
</pallas_src>

<mosaic_0001>
module attributes {stable_mosaic.version = 11 : i64} {
  func.func @_conv2d_kernel(%arg0: i32, %arg1: memref<1x4x256xf32, #tpu.memory_space<vmem>>, %arg2: memref<8x37xf32, #tpu.memory_space<vmem>>, %arg3: memref<1x8x224xf32, #tpu.memory_space<vmem>>, %arg4: memref<37x224xf32, #tpu.memory_space<vmem>>) attributes {dimension_semantics = [#tpu.dimension_semantics<parallel>], iteration_bounds = array<i64: 2>, scalar_prefetch = 0 : i64, scratch_operands = 1 : i64, tpu.core_type = #tpu.core_type<tc>, window_params = [{transform_indices = @transform_0, window_bounds = array<i64: 1, 4, 256>}, {pipeline_mode = #tpu.pipeline_mode<synchronous>, transform_indices = @transform_1, window_bounds = array<i64: 8, 37>}, {transform_indices = @transform_2, window_bounds = array<i64: 1, 8, 224>}]} {
    %cst = arith.constant 1.000000e+00 : f32
    %0 = vector.broadcast %cst : f32 to vector<1x224xf32>
    %c36 = arith.constant 36 : index
    %c0 = arith.constant 0 : index
    %1 = vector.load %arg4[%c36, %c0] : memref<37x224xf32, #tpu.memory_space<vmem>>, vector<1x224xf32>
    tpu.vector_store %arg4[%c36, %c0], %0 {strides = array<i32>} : memref<37x224xf32, #tpu.memory_space<vmem>>, vector<1x224xf32>,
    %c0_0 = arith.constant 0 : index
    %c0_1 = arith.constant 0 : index
    %c0_2 = arith.constant 0 : index
    %2 = vector.load %arg1[%c0_0, %c0_1, %c0_2] : memref<1x4x256xf32, #tpu.memory_space<vmem>>, vector<1x4x224xf32>
    %3 = vector.shape_cast %2 : vector<1x4x224xf32> to vector<4x224xf32>
    %c0_3 = arith.constant 0 : index
    %c0_4 = arith.constant 0 : index
    %4 = vector.load %arg4[%c0_3, %c0_4] : memref<37x224xf32, #tpu.memory_space<vmem>>, vector<4x224xf32>
    tpu.vector_store %arg4[%c0_3, %c0_4], %3 {strides = array<i32>} : memref<37x224xf32, #tpu.memory_space<vmem>>, vector<4x224xf32>,
    %c0_5 = arith.constant 0 : index
    %c0_6 = arith.constant 0 : index
    %c1 = arith.constant 1 : index
    %5 = vector.load %arg1[%c0_5, %c0_6, %c1] : memref<1x4x256xf32, #tpu.memory_space<vmem>>, vector<1x4x224xf32>
    %6 = vector.shape_cast %5 : vector<1x4x224xf32> to vector<4x224xf32>
    %c4 = arith.constant 4 : index
    %c0_7 = arith.constant 0 : index
    %7 = vector.load %arg4[%c4, %c0_7] : memref<37x224xf32, #tpu.memory_space<vmem>>, vector<4x224xf32>
    tpu.vector_store %arg4[%c4, %c0_7], %6 {strides = array<i32>} : memref<37x224xf32, #tpu.memory_space<vmem>>, vector<4x224xf32>,
    %c0_8 = arith.constant 0 : index
    %c0_9 = arith.constant 0 : index
    %c2 = arith.constant 2 : index
    %8 = vector.load %arg1[%c0_8, %c0_9, %c2] : memref<1x4x256xf32, #tpu.memory_space<vmem>>, vector<1x4x224xf32>
    %9 = vector.shape_cast %8 : vector<1x4x224xf32> to vector<4x224xf32>
    %c8 = arith.constant 8 : index
    %c0_10 = arith.constant 0 : index
    %10 = vector.load %arg4[%c8, %c0_10] : memref<37x224xf32, #tpu.memory_space<vmem>>, vector<4x224xf32>
    tpu.vector_store %arg4[%c8, %c0_10], %9 {strides = array<i32>} : memref<37x224xf32, #tpu.memory_space<vmem>>, vector<4x224xf32>,
    %c0_11 = arith.constant 0 : index
    %c0_12 = arith.constant 0 : index
    %c16 = arith.constant 16 : index
    %11 = vector.load %arg1[%c0_11, %c0_12, %c16] : memref<1x4x256xf32, #tpu.memory_space<vmem>>, vector<1x4x224xf32>
    %12 = vector.shape_cast %11 : vector<1x4x224xf32> to vector<4x224xf32>
    %c12 = arith.constant 12 : index
    %c0_13 = arith.constant 0 : index
    %13 = vector.load %arg4[%c12, %c0_13] : memref<37x224xf32, #tpu.memory_space<vmem>>, vector<4x224xf32>
    tpu.vector_store %arg4[%c12, %c0_13], %12 {strides = array<i32>} : memref<37x224xf32, #tpu.memory_space<vmem>>, vector<4x224xf32>,
    %c0_14 = arith.constant 0 : index
    %c0_15 = arith.constant 0 : index
    %c17 = arith.constant 17 : index
    %14 = vector.load %arg1[%c0_14, %c0_15, %c17] : memref<1x4x256xf32, #tpu.memory_space<vmem>>, vector<1x4x224xf32>
    %15 = vector.shape_cast %14 : vector<1x4x224xf32> to vector<4x224xf32>
    %c16_16 = arith.constant 16 : index
    %c0_17 = arith.constant 0 : index
    %16 = vector.load %arg4[%c16_16, %c0_17] : memref<37x224xf32, #tpu.memory_space<vmem>>, vector<4x224xf32>
    tpu.vector_store %arg4[%c16_16, %c0_17], %15 {strides = array<i32>} : memref<37x224xf32, #tpu.memory_space<vmem>>, vector<4x224xf32>,
    %c0_18 = arith.constant 0 : index
    %c0_19 = arith.constant 0 : index
    %c18 = arith.constant 18 : index
    %17 = vector.load %arg1[%c0_18, %c0_19, %c18] : memref<1x4x256xf32, #tpu.memory_space<vmem>>, vector<1x4x224xf32>
    %18 = vector.shape_cast %17 : vector<1x4x224xf32> to vector<4x224xf32>
    %c20 = arith.constant 20 : index
    %c0_20 = arith.constant 0 : index
    %19 = vector.load %arg4[%c20, %c0_20] : memref<37x224xf32, #tpu.memory_space<vmem>>, vector<4x224xf32>
    tpu.vector_store %arg4[%c20, %c0_20], %18 {strides = array<i32>} : memref<37x224xf32, #tpu.memory_space<vmem>>, vector<4x224xf32>,
    %c0_21 = arith.constant 0 : index
    %c0_22 = arith.constant 0 : index
    %c32 = arith.constant 32 : index
    %20 = vector.load %arg1[%c0_21, %c0_22, %c32] : memref<1x4x256xf32, #tpu.memory_space<vmem>>, vector<1x4x224xf32>
    %21 = vector.shape_cast %20 : vector<1x4x224xf32> to vector<4x224xf32>
    %c24 = arith.constant 24 : index
    %c0_23 = arith.constant 0 : index
    %22 = vector.load %arg4[%c24, %c0_23] : memref<37x224xf32, #tpu.memory_space<vmem>>, vector<4x224xf32>
    tpu.vector_store %arg4[%c24, %c0_23], %21 {strides = array<i32>} : memref<37x224xf32, #tpu.memory_space<vmem>>, vector<4x224xf32>,
    %c0_24 = arith.constant 0 : index
    %c0_25 = arith.constant 0 : index
    %c33 = arith.constant 33 : index
    %23 = vector.load %arg1[%c0_24, %c0_25, %c33] : memref<1x4x256xf32, #tpu.memory_space<vmem>>, vector<1x4x223xf32>
    %24 = vector.shape_cast %23 : vector<1x4x223xf32> to vector<4x223xf32>
    %c28 = arith.constant 28 : index
    %c0_26 = arith.constant 0 : index
    %25 = vector.load %arg4[%c28, %c0_26] : memref<37x224xf32, #tpu.memory_space<vmem>>, vector<4x223xf32>
    tpu.vector_store %arg4[%c28, %c0_26], %24 {strides = array<i32>} : memref<37x224xf32, #tpu.memory_space<vmem>>, vector<4x223xf32>,
    %cst_27 = arith.constant 0.000000e+00 : f32
    %26 = vector.broadcast %cst_27 : f32 to vector<4x1xf32>
    %c28_28 = arith.constant 28 : index
    %c223 = arith.constant 223 : index
    %27 = vector.load %arg4[%c28_28, %c223] : memref<37x224xf32, #tpu.memory_space<vmem>>, vector<4x1xf32>
    tpu.vector_store %arg4[%c28_28, %c223], %26 {strides = array<i32>} : memref<37x224xf32, #tpu.memory_space<vmem>>, vector<4x1xf32>,
    %c0_29 = arith.constant 0 : index
    %c0_30 = arith.constant 0 : index
    %c34 = arith.constant 34 : index
    %28 = vector.load %arg1[%c0_29, %c0_30, %c34] : memref<1x4x256xf32, #tpu.memory_space<vmem>>, vector<1x4x222xf32>
    %29 = vector.shape_cast %28 : vector<1x4x222xf32> to vector<4x222xf32>
    %c32_31 = arith.constant 32 : index
    %c0_32 = arith.constant 0 : index
    %30 = vector.load %arg4[%c32_31, %c0_32] : memref<37x224xf32, #tpu.memory_space<vmem>>, vector<4x222xf32>
    tpu.vector_store %arg4[%c32_31, %c0_32], %29 {strides = array<i32>} : memref<37x224xf32, #tpu.memory_space<vmem>>, vector<4x222xf32>,
    %cst_33 = arith.constant 0.000000e+00 : f32
    %31 = vector.broadcast %cst_33 : f32 to vector<4x2xf32>
    %c32_34 = arith.constant 32 : index
    %c222 = arith.constant 222 : index
    %32 = vector.load %arg4[%c32_34, %c222] : memref<37x224xf32, #tpu.memory_space<vmem>>, vector<4x2xf32>
    tpu.vector_store %arg4[%c32_34, %c222], %31 {strides = array<i32>} : memref<37x224xf32, #tpu.memory_space<vmem>>, vector<4x2xf32>,
    %c0_35 = arith.constant 0 : index
    %c0_36 = arith.constant 0 : index
    %33 = vector.load %arg2[%c0_35, %c0_36] : memref<8x37xf32, #tpu.memory_space<vmem>>, vector<8x37xf32>
    %c0_37 = arith.constant 0 : index
    %c0_38 = arith.constant 0 : index
    %34 = vector.load %arg4[%c0_37, %c0_38] : memref<37x224xf32, #tpu.memory_space<vmem>>, vector<37x224xf32>
    %cst_39 = arith.constant dense<0.000000e+00> : vector<8x224xf32>
    %35 = tpu.matmul %33, %34, %cst_39 {dimension_numbers = #tpu.dot_dimension_numbers<[1], [0], [0], [1], [0, 0, 1, 1], [], []>} : vector<8x37xf32>, vector<37x224xf32>, vector<8x224xf32> -> vector<8x224xf32>
    %c0_40 = arith.constant 0 : index
    %c0_41 = arith.constant 0 : index
    %c0_42 = arith.constant 0 : index
    %36 = vector.load %arg3[%c0_40, %c0_41, %c0_42] : memref<1x8x224xf32, #tpu.memory_space<vmem>>, vector<1x8x224xf32>
    %37 = vector.shape_cast %36 : vector<1x8x224xf32> to vector<8x224xf32>
    %38 = vector.shape_cast %35 : vector<8x224xf32> to vector<1x8x224xf32>
    tpu.vector_store %arg3[%c0_40, %c0_41, %c0_42], %38 {strides = array<i32>} : memref<1x8x224xf32, #tpu.memory_space<vmem>>, vector<1x8x224xf32>,
    return
  }
  func.func @transform_0(%arg0: i32) -> (i32, i32, i32) {
    %c0_i32 = arith.constant 0 : i32
    %c0_i32_0 = arith.constant 0 : i32
    %c0_i32_1 = arith.constant 0 : i32
    return %arg0, %c0_i32, %c0_i32_0 : i32, i32, i32
  }
  func.func @transform_1(%arg0: i32) -> (i32, i32) {
    %c0_i32 = arith.constant 0 : i32
    %c0_i32_0 = arith.constant 0 : i32
    %c0_i32_1 = arith.constant 0 : i32
    return %c0_i32, %c0_i32_0 : i32, i32
  }
  func.func @transform_2(%arg0: i32) -> (i32, i32, i32) {
    %c0_i32 = arith.constant 0 : i32
    %c0_i32_0 = arith.constant 0 : i32
    %c0_i32_1 = arith.constant 0 : i32
    return %arg0, %c0_i32, %c0_i32_0 : i32, i32, i32
  }
}

</mosaic_0001>

<llo_original>
// kernel: norm_conv2d.1
$region0: #{norm_conv2d.1}
  #allocation0 [shape = 'u32[]', space=smem, size = 0x4, offset = 0x4, fixed_abs, tag = 'smem constant byte address 0x4 - core index']
  #allocation1 [shape = 'u32[72,128]{1,0:T(1,128)}', space=vmem, size = 0x9000, scoped, tag = 'internal scratch']
  #allocation2 [shape = 'f32[37,224]{1,0:T(8,128)}', space=vmem, size = 0xa000, scoped, tag = 'scratch operand']
  %s0 = inlined_call_operand.vmem [shape: f32[2,4,256], index: 0, kind: input, shape index: {}]
  %s1 = inlined_call_operand.vmem [shape: f32[8,37], index: 1, kind: input, shape index: {}]
  %s2 = inlined_call_operand.vmem [shape: f32[2,8,224], index: 2, kind: output, shape index: {}]
  %s3 = sld [smem:[#allocation0]]
  $region41: #{norm_conv2d.1} parent=0
    _
  %s5 = ssub.s32 1, %s3
  %s6 = scalar_select 0, %s5, %s3
  loop: start=0, step=1, limit=4
  $region2: #{norm_conv2d.1} parent=0 // loop_pre_header
    _
  $region3: #{norm_conv2d.1} parent=0 // loop_header
    %s8 = sphi 0, %s12
    %p9 = scmp.ge.s32.totalorder %s8, 4
    %s18 = sphi 0, %s20
    %s21 = sphi 0, %s18
    %s22 = sphi 0, %s21
    %s38 = sphi 0, %s22
    %s42 = sphi 0, %s42
    %s44 = sphi 0, %s42
    %s45 = sphi 0, %s44
    %s59 = sphi 0, %s45
    %s65 = sphi 0, %s67
    %s68 = sphi 0, %s65
    %s69 = sphi 0, %s68
    %s85 = sphi 0, %s69
  $region4: #{norm_conv2d.1} parent=0 // loop_header_branch
    %11 = sbr.rel (%p9) target = $region8
  $region5: #{norm_conv2d.1} parent=0 // loop_body
    %s13 = ssub.s32 %s8, 1
    %s14 = ssub.s32 %s8, 2
    %s15 = sadd.s32 %s8, 1
    %s16 = ssub.s32 %s8, %s15
    %p17 = scmp.eq.s32.totalorder %s16, 0
    %s19 = sadd.s32 %s18, 1
    %s20 = scalar_select %p17, %s18, %s19
    %p23 = pneg %p17
    %p24 = scmp.eq.s32.totalorder %s8, 1
    %p25 = por %p23, %p24
    %p26 = scmp.ne.s32.totalorder %s18, %s21
    %p27 = scmp.eq.s32.totalorder %s8, 0
    %p28 = por %p26, %p27
    %p29 = scmp.ne.s32.totalorder %s18, %s21
    %p30 = scmp.eq.s32.totalorder %s13, 1
    %p31 = por %p29, %p30
    %p32 = scmp.ne.s32.totalorder %s21, %s22
    %p33 = scmp.eq.s32.totalorder %s13, 0
    %p34 = por %p32, %p33
    %p35 = scmp.ne.s32.totalorder %s21, %s22
    %p36 = scmp.eq.s32.totalorder %s14, 1
    %p37 = por %p35, %p36
    %p39 = scmp.ne.s32.totalorder %s22, %s38
    %p40 = scmp.eq.s32.totalorder %s14, 0
    %p41 = por %p39, %p40
    %s43 = sadd.s32 %s42, 1
    %p46 = scmp.eq.s32.totalorder %s8, 1
    %p47 = scmp.ne.s32.totalorder %s42, %s44
    %p48 = scmp.eq.s32.totalorder %s8, 0
    %p49 = por %p47, %p48
    %p50 = scmp.ne.s32.totalorder %s42, %s44
    %p51 = scmp.eq.s32.totalorder %s13, 1
    %p52 = por %p50, %p51
    %p53 = scmp.ne.s32.totalorder %s44, %s45
    %p54 = scmp.eq.s32.totalorder %s13, 0
    %p55 = por %p53, %p54
    %p56 = scmp.ne.s32.totalorder %s44, %s45
    %p57 = scmp.eq.s32.totalorder %s14, 1
    %p58 = por %p56, %p57
    %p60 = scmp.ne.s32.totalorder %s45, %s59
    %p61 = scmp.eq.s32.totalorder %s14, 0
    %p62 = por %p60, %p61
    %s63 = ssub.s32 %s8, %s15
    %p64 = scmp.eq.s32.totalorder %s63, 0
    %s66 = sadd.s32 %s65, 1
    %s67 = scalar_select %p64, %s65, %s66
    %p70 = pneg %p64
    %p71 = scmp.eq.s32.totalorder %s8, 1
    %p72 = por %p70, %p71
    %p73 = scmp.ne.s32.totalorder %s65, %s68
    %p74 = scmp.eq.s32.totalorder %s8, 0
    %p75 = por %p73, %p74
    %p76 = scmp.ne.s32.totalorder %s65, %s68
    %p77 = scmp.eq.s32.totalorder %s13, 1
    %p78 = por %p76, %p77
    %p79 = scmp.ne.s32.totalorder %s68, %s69
    %p80 = scmp.eq.s32.totalorder %s13, 0
    %p81 = por %p79, %p80
    %p82 = scmp.ne.s32.totalorder %s68, %s69
    %p83 = scmp.eq.s32.totalorder %s14, 1
    %p84 = por %p82, %p83
    %p86 = scmp.ne.s32.totalorder %s69, %s85
    %p87 = scmp.eq.s32.totalorder %s14, 0
    %p88 = por %p86, %p87
    %p89 = scmp.le.s32.totalorder 1, %s8
    %p90 = scmp.lt.s32.totalorder %s8, 3
    %p91 = pnand %p89, %p90
    %p92 = pneg %p91
    // Predicated region
    $region9: #{norm_conv2d.1} parent=5 // pred_check
      _
    $region10: #{norm_conv2d.1} parent=5 // pred_check_branch
      %94 = sbr.rel (%p91) target = $region12
    $region11: #{norm_conv2d.1} parent=5 // pred_region
      %s95 = ssub.s32 %s8, 1
      // Predicated region
      $region13: #{norm_conv2d.1} parent=11 // pred_check
        %p96 = pneg %p55
      $region14: #{norm_conv2d.1} parent=11 // pred_check_branch
        %98 = sbr.rel (%p96) target = $region16
      $region15: #{norm_conv2d.1} parent=11 // pred_region
        _
      $region16: #{norm_conv2d.1} parent=11 // pred_fallthru
        _
    $region12: #{norm_conv2d.1} parent=5 // pred_fallthru
      _
    %p99 = scmp.lt.s32.totalorder %s8, 2
    // Predicated region
    $region17: #{norm_conv2d.1} parent=5 // pred_check
      %p100 = pneg %p99
    $region18: #{norm_conv2d.1} parent=5 // pred_check_branch
      %102 = sbr.rel (%p100) target = $region20
    $region19: #{norm_conv2d.1} parent=5 // pred_region
      // Predicated region
      $region21: #{norm_conv2d.1} parent=19 // pred_check
        %p103 = pneg %p28
      $region22: #{norm_conv2d.1} parent=19 // pred_check_branch
        %105 = sbr.rel (%p103) target = $region24
      $region23: #{norm_conv2d.1} parent=19 // pred_region
        %p106 = scmp.lt.s32.totalorder %s8, 1
        %s107 = scalar_select %p106, %s8, 1
        %s108 = smul.addr %s107, 2
        %s109 = smul.addr %s108, 4
        %s110 = scalar_lea.vmem %s0, %s109
      $region24: #{norm_conv2d.1} parent=19 // pred_fallthru
        _
    $region20: #{norm_conv2d.1} parent=5 // pred_fallthru
      _
    %p111 = scmp.le.s32.totalorder 1, %s8
    %p112 = scmp.lt.s32.totalorder %s8, 3
    %p113 = pnand %p111, %p112
    %p114 = pneg %p113
    // Predicated region
    $region25: #{norm_conv2d.1} parent=5 // pred_check
      _
    $region26: #{norm_conv2d.1} parent=5 // pred_check_branch
      %116 = sbr.rel (%p113) target = $region28
    $region27: #{norm_conv2d.1} parent=5 // pred_region
      %s117 = ssub.s32 %s8, 1
      %p118 = scmp.lt.s32.totalorder %s13, 1
      %s119 = scalar_select %p118, %s13, 1
      %s120 = smul.addr %s119, 2
      %s121 = smul.addr %s120, 4
      %s122 = scalar_lea.vmem %s0, %s121
      %p123 = pneg %p34
      %p124 = pneg %p31
      %p125 = pneg %p55
      %p126 = pneg %p52
      %p127 = pneg %p81
      %p128 = pneg %p78
      %p129 = scmp.lt.s32.totalorder %s13, 1
      %s130 = scalar_select %p129, %s13, 1
      %s131 = smul.addr %s130, 2
      %s132 = smul.addr %s131, 8
      %s133 = scalar_lea.vmem %s2, %s132
      %p134 = scmp.lt.s32.totalorder %s13, 1
      %s135 = scalar_select %p134, %s13, 1
      %s136 = smul.addr %s135, 2
      %s137 = smul.addr %s136, 4
      %s138 = scalar_lea.vmem %s0, %s137
      %p139 = scmp.lt.s32.totalorder %s13, 1
      %s140 = scalar_select %p139, %s13, 1
      %s141 = smul.addr %s140, 2
      %s142 = smul.addr %s141, 8
      %s143 = scalar_lea.vmem %s2, %s142
      %v144 = vlaneseq
      %vm145 = vcmp.ge.s32.totalorder %v144, 0
      %vm146 = vcmp.lt.s32.totalorder %v144, 224
      %vm147 = vmand %vm145, %vm146
      %s148 = scalar_lea.vmem [#allocation2], 68
      %149 = vst.msk [vmem:[%s148] ss:$8 sm:$0x3] %vm147, 1.0
      %150 = vst.msk [vmem:[%s148] ss:$8 sm:$0x0] %vm147, 1.0
      %v151 = vld [vmem:[%s138] sm:$0xff]
      %153 = vst [vmem:[#allocation1] ss:$2 sm:$0xff] %v151
      %v154 = vld.sshfl [vmem:[#allocation1] sm:$0xff pattern:$0x75316420]
      %v155 = vld.sshfl [vmem:[#allocation1 + $0x8] sm:$0xff pattern:$0x75316420]
      %158 = vst [vmem:[#allocation2] sm:$0xf] %v154
      %vm159 = vcmask 781312
      %160 = vst.msk [vmem:[#allocation2 + $0x8] sm:$0xf] %vm159, %v155
      %v161 = vld [vmem:[%s138] sm:$0xff]
      %s163 = scalar_lea.vmem [#allocation1], 1
      %164 = vst [vmem:[%s163] ss:$2 sm:$0xff] %v161
      %v165 = vld.sshfl [vmem:[#allocation1] sm:$0xff pattern:$0x75316420]
      %v166 = vld.sshfl [vmem:[#allocation1 + $0x8] sm:$0xff pattern:$0x75316420]
      %167 = vrot.lane.b32.xlu0 %v165, 127
      %v168 = vpop.permute.xlu0 %167
      %169 = vrot.lane.b32.xlu0 %v166, 127
      %v170 = vpop.permute.xlu0 %169
      %vm171 = vcmask 1039360
      %v172 = vsel %vm171, %v168, %v170
      %175 = vst [vmem:[#allocation2] sm:$0xf0] %v172
      %vm176 = vcmask 785412
      %177 = vst.msk [vmem:[#allocation2 + $0x8] sm:$0xf0] %vm176, %v170
      %v178 = vld [vmem:[%s138] sm:$0xff]
      %180 = vst [vmem:[#allocation1] ss:$2 sm:$0xff] %v178
      %v181 = vld.sshfl [vmem:[#allocation1] sm:$0xff pattern:$0x75316420]
      %v182 = vld.sshfl [vmem:[#allocation1 + $0x8] sm:$0xff pattern:$0x75316420]
      %183 = vrot.lane.b32.xlu0 %v181, 126
      %v184 = vpop.permute.xlu0 %183
      %185 = vrot.lane.b32.xlu0 %v182, 126
      %v186 = vpop.permute.xlu0 %185
      %vm187 = vcmask 1031168
      %v188 = vsel %vm187, %v184, %v186
      %191 = vst [vmem:[#allocation2 + $0x10] sm:$0xf] %v188
      %192 = vst.msk [vmem:[#allocation2 + $0x18] sm:$0xf] %vm159, %v186
      %v193 = vld [vmem:[%s138] sm:$0xff]
      %s195 = scalar_lea.vmem [#allocation1], 1
      %196 = vst [vmem:[%s195] ss:$2 sm:$0xff] %v193
      %v197 = vld.sshfl [vmem:[#allocation1] sm:$0xff pattern:$0x75316420]
      %v198 = vld.sshfl [vmem:[#allocation1 + $0x8] sm:$0xff pattern:$0x75316420]
      %199 = vrot.lane.b32.xlu0 %v197, 112
      %v200 = vpop.permute.xlu0 %199
      %201 = vrot.lane.b32.xlu0 %v198, 112
      %v202 = vpop.permute.xlu0 %201
      %vm203 = vcmask 916480
      %v204 = vsel %vm203, %v200, %v202
      %207 = vst [vmem:[#allocation2 + $0x10] sm:$0xf0] %v204
      %208 = vst.msk [vmem:[#allocation2 + $0x18] sm:$0xf0] %vm176, %v202
      %v209 = vld [vmem:[%s138] sm:$0xff]
      %211 = vst [vmem:[#allocation1] ss:$2 sm:$0xff] %v209
      %v212 = vld.sshfl [vmem:[#allocation1] sm:$0xff pattern:$0x75316420]
      %v213 = vld.sshfl [vmem:[#allocation1 + $0x8] sm:$0xff pattern:$0x75316420]
      %214 = vrot.lane.b32.xlu0 %v212, 111
      %v215 = vpop.permute.xlu0 %214
      %216 = vrot.lane.b32.xlu0 %v213, 111
      %v217 = vpop.permute.xlu0 %216
      %vm218 = vcmask 908288
      %v219 = vsel %vm218, %v215, %v217
      %222 = vst [vmem:[#allocation2 + $0x20] sm:$0xf] %v219
      %223 = vst.msk [vmem:[#allocation2 + $0x28] sm:$0xf] %vm159, %v217
      %v224 = vld [vmem:[%s138] sm:$0xff]
      %s226 = scalar_lea.vmem [#allocation1], 1
      %227 = vst [vmem:[%s226] ss:$2 sm:$0xff] %v224
      %v228 = vld.sshfl [vmem:[#allocation1] sm:$0xff pattern:$0x75316420]
      %v229 = vld.sshfl [vmem:[#allocation1 + $0x8] sm:$0xff pattern:$0x75316420]
      %230 = vrot.lane.b32.xlu0 %v228, 110
      %v231 = vpop.permute.xlu0 %230
      %232 = vrot.lane.b32.xlu0 %v229, 110
      %v233 = vpop.permute.xlu0 %232
      %vm234 = vcmask 900096
      %v235 = vsel %vm234, %v231, %v233
      %238 = vst [vmem:[#allocation2 + $0x20] sm:$0xf0] %v235
      %239 = vst.msk [vmem:[#allocation2 + $0x28] sm:$0xf0] %vm176, %v233
      %v240 = vld [vmem:[%s138] sm:$0xff]
      %242 = vst [vmem:[#allocation1] ss:$2 sm:$0xff] %v240
      %v243 = vld.sshfl [vmem:[#allocation1] sm:$0xff pattern:$0x75316420]
      %v244 = vld.sshfl [vmem:[#allocation1 + $0x8] sm:$0xff pattern:$0x75316420]
      %245 = vrot.lane.b32.xlu0 %v243, 96
      %v246 = vpop.permute.xlu0 %245
      %247 = vrot.lane.b32.xlu0 %v244, 96
      %v248 = vpop.permute.xlu0 %247
      %vm249 = vcmask 785408
      %v250 = vsel %vm249, %v246, %v248
      %253 = vst [vmem:[#allocation2 + $0x30] sm:$0xf] %v250
      %254 = vst.msk [vmem:[#allocation2 + $0x38] sm:$0xf] %vm159, %v248
      %v255 = vld [vmem:[%s138] sm:$0xff]
      %s257 = scalar_lea.vmem [#allocation1], 1
      %258 = vst [vmem:[%s257] ss:$2 sm:$0xff] %v255
      %v259 = vld.sshfl [vmem:[#allocation1] sm:$0xff pattern:$0x75316420]
      %v260 = vld.sshfl [vmem:[#allocation1 + $0x8] sm:$0xff pattern:$0x75316420]
      %261 = vrot.lane.b32.xlu0 %v259, 95
      %v262 = vpop.permute.xlu0 %261
      %263 = vrot.lane.b32.xlu0 %v260, 95
      %v264 = vpop.permute.xlu0 %263
      %vm265 = vcmask 777216
      %v266 = vsel %vm265, %v262, %v264
      %269 = vst [vmem:[#allocation2 + $0x30] sm:$0xf0] %v266
      %vm270 = vcmask 777220
      %271 = vst.msk [vmem:[#allocation2 + $0x38] sm:$0xf0] %vm270, %v264
      %vm272 = vcmask 786172
      %273 = vst.msk [vmem:[#allocation2 + $0x38] sm:$0xf0] %vm272, 0.0
      %v274 = vld [vmem:[%s138] sm:$0xff]
      %276 = vst [vmem:[#allocation1] ss:$2 sm:$0xff] %v274
      %v277 = vld.sshfl [vmem:[#allocation1] sm:$0xff pattern:$0x75316420]
      %v278 = vld.sshfl [vmem:[#allocation1 + $0x8] sm:$0xff pattern:$0x75316420]
      %279 = vrot.lane.b32.xlu0 %v277, 94
      %v280 = vpop.permute.xlu0 %279
      %281 = vrot.lane.b32.xlu0 %v278, 94
      %v282 = vpop.permute.xlu0 %281
      %vm283 = vcmask 769024
      %v284 = vsel %vm283, %v280, %v282
      %287 = vst [vmem:[#allocation2 + $0x40] sm:$0xf] %v284
      %vm288 = vcmask 764928
      %289 = vst.msk [vmem:[#allocation2 + $0x48] sm:$0xf] %vm288, %v282
      %vm290 = vcmask 782064
      %291 = vst.msk [vmem:[#allocation2 + $0x48] sm:$0xf] %vm290, 0.0
      %v292 = vld [vmem:[%s1] sm:$0xff]
      %v293 = vld [vmem:[#allocation2] sm:$0xff]
      %v294 = vld [vmem:[#allocation2 + $0x8] sm:$0xff]
      %v295 = vld [vmem:[#allocation2 + $0x10] sm:$0xff]
      %v296 = vld [vmem:[#allocation2 + $0x18] sm:$0xff]
      %v297 = vld [vmem:[#allocation2 + $0x20] sm:$0xff]
      %v298 = vld [vmem:[#allocation2 + $0x28] sm:$0xff]
      %v299 = vld [vmem:[#allocation2 + $0x30] sm:$0xff]
      %v300 = vld [vmem:[#allocation2 + $0x38] sm:$0xff]
      %v301 = vld [vmem:[#allocation2 + $0x40] sm:$0x1f]
      %v302 = vld [vmem:[#allocation2 + $0x48] sm:$0x1f]
      %vm303 = vcmask 302080
      %v305 = vsel %vm303, %v292, 0
      %vm307 = vcmask 1044480
      %v309 = vsel %vm307, %v301, 0
      %v312 = vsel %vm307, %v302, 0
      %314 = vmatpush.msra.mxu0 0.0
      %315 = vmatpush.msra.mxu0 0.0
      %316 = vmatpush.msra.mxu0 0.0
      %317 = vmatpush.msra.mxu0 0.0
      %318 = vmatpush.msra.mxu0 0.0
      %319 = vmatpush.msra.mxu0 0.0
      %320 = vmatpush.msra.mxu0 0.0
      %321 = vmatpush.msra.mxu0 0.0
      %322 = vmatpush.msra.mxu0 0.0
      %323 = vmatpush.msra.mxu0 0.0
      %324 = vmatpush.msra.mxu0 0.0
      %325 = vmatpush.msra.mxu0 %v309
      %326 = vmatpush.msra.mxu0 %v299
      %327 = vmatpush.msra.mxu0 %v297
      %328 = vmatpush.msra.mxu0 %v295
      %329 = vmatpush.msra.mxu0 %v293
      %330 = vmatmul.f32.gmra.mxu0 %v305
      %v331 = vpop.f32.mrf.mxu0
      %v332 = vadd.f32 0.0, %v331
      %333 = vdwg.mxu0
      %334 = vmatpush.msra.mxu0 0.0
      %335 = vmatpush.msra.mxu0 0.0
      %336 = vmatpush.msra.mxu0 0.0
      %337 = vmatpush.msra.mxu0 0.0
      %338 = vmatpush.msra.mxu0 0.0
      %339 = vmatpush.msra.mxu0 0.0
      %340 = vmatpush.msra.mxu0 0.0
      %341 = vmatpush.msra.mxu0 0.0
      %342 = vmatpush.msra.mxu0 0.0
      %343 = vmatpush.msra.mxu0 0.0
      %344 = vmatpush.msra.mxu0 0.0
      %345 = vmatpush.msra.mxu0 %v312
      %346 = vmatpush.msra.mxu0 %v300
      %347 = vmatpush.msra.mxu0 %v298
      %348 = vmatpush.msra.mxu0 %v296
      %349 = vmatpush.msra.mxu0 %v294
      %350 = vmatmul.f32.gmra.mxu0 %v305
      %v351 = vpop.f32.mrf.mxu0
      %v352 = vadd.f32 0.0, %v351
      %353 = vdwg.mxu0
      %354 = vst [vmem:[%s143] sm:$0xff] %v332
      %355 = vst.msk [vmem:[%s143 + $0x8] sm:$0xff] %vm249, %v352
      %p356 = scmp.lt.s32.totalorder %s13, 1
      %s357 = scalar_select %p356, %s13, 1
      %s358 = smul.addr %s357, 2
      %s359 = smul.addr %s358, 8
      %s360 = scalar_lea.vmem %s2, %s359
      // Predicated region
      $region29: #{norm_conv2d.1} parent=27 // pred_check
        %p361 = pneg %p78
      $region30: #{norm_conv2d.1} parent=27 // pred_check_branch
        %363 = sbr.rel (%p361) target = $region32
      $region31: #{norm_conv2d.1} parent=27 // pred_region
        _
      $region32: #{norm_conv2d.1} parent=27 // pred_fallthru
        _
    $region28: #{norm_conv2d.1} parent=5 // pred_fallthru
      _
    %p364 = scmp.le.s32.totalorder 2, %s8
    // Predicated region
    $region33: #{norm_conv2d.1} parent=5 // pred_check
      %p365 = pneg %p364
    $region34: #{norm_conv2d.1} parent=5 // pred_check_branch
      %367 = sbr.rel (%p365) target = $region36
    $region35: #{norm_conv2d.1} parent=5 // pred_region
      %s368 = ssub.s32 %s8, 2
      // Predicated region
      $region37: #{norm_conv2d.1} parent=35 // pred_check
        %p369 = pneg %p84
      $region38: #{norm_conv2d.1} parent=35 // pred_check_branch
        %371 = sbr.rel (%p369) target = $region40
      $region39: #{norm_conv2d.1} parent=35 // pred_region
        %p372 = scmp.lt.s32.totalorder %s14, 1
        %s373 = scalar_select %p372, %s14, 1
        %s374 = smul.addr %s373, 2
        %s375 = smul.addr %s374, 8
        %s376 = scalar_lea.vmem %s2, %s375
      $region40: #{norm_conv2d.1} parent=35 // pred_fallthru
        _
    $region36: #{norm_conv2d.1} parent=5 // pred_fallthru
      _
  $region6: #{norm_conv2d.1} parent=0 // loop_footer
    %s12 = sadd.s32 1, %s8
  $region7: #{norm_conv2d.1} parent=0 // loop_footer_branch
    %7 = sbr.rel target = $region3
  $region8: #{norm_conv2d.1} parent=0 // loop_exit
    _

</llo_original>
